<compile_context>
chip_gen: v7x
topology: tpu7x:2x2x1
jax: 0.10.0
libtpu: 0.0.40
codegen_flags: <defaults>
</compile_context>

<pallas_src>
import jax
import jax.numpy as jnp
from jax.experimental import pallas as pl
from jax.experimental.pallas import tpu as pltpu

IN_FEATURES = 60
OUT_FEATURES = 11
HIDDEN = 256
N_OUT_PAD = 128   # fc4 output features padded 11 -> 128 (lane-dense stores)


def mlp_kernel(x_ref,
               w1_ref, b1_ref,
               w2_ref, b2_ref,
               w3_ref, b3_ref,
               w4_ref, b4_ref,
               o_ref):
    # bf16 operands on the MXU, f32 accumulation; bias add / ReLU in f32 on the
    # VPU (v5e has no bf16 VPU).  Output stored as bf16 (lane-dense 128 wide).
    x = x_ref[...].astype(jnp.bfloat16)
    h = jnp.dot(x, w1_ref[...], preferred_element_type=jnp.float32)
    h = jnp.maximum(h + b1_ref[...], 0.0)

    h = jnp.dot(h.astype(jnp.bfloat16), w2_ref[...],
                preferred_element_type=jnp.float32)
    h = jnp.maximum(h + b2_ref[...], 0.0)

    h = jnp.dot(h.astype(jnp.bfloat16), w3_ref[...],
                preferred_element_type=jnp.float32)
    h = jnp.maximum(h + b3_ref[...], 0.0)

    h = jnp.dot(h.astype(jnp.bfloat16), w4_ref[...],
                preferred_element_type=jnp.float32)
    o_ref[...] = (h + b4_ref[...]).astype(o_ref.dtype)


def prepare_params(params):
    """One-time weight prep (call once, outside the per-forward path).

    Pads fc4's output dim 11 -> 128 with zeros (zero columns contribute
    nothing), casts weights to bf16, keeps biases in f32.
    """
    (w1, b1), (w2, b2), (w3, b3), (w4, b4) = params
    w4p = jnp.zeros((HIDDEN, N_OUT_PAD), jnp.float32).at[:, :OUT_FEATURES].set(w4)
    b4p = jnp.zeros((1, N_OUT_PAD), jnp.float32).at[:, :OUT_FEATURES].set(b4)
    bf16 = lambda w: w.astype(jnp.bfloat16)
    return (bf16(w1), b1, bf16(w2), b2, bf16(w3), b3, bf16(w4p), b4p)


def _choose_tb(B: int) -> int:
    """Pick the batch tile.

    * B <= 512: one tile covering the whole batch (block == full dim is always
      a legal BlockSpec, regardless of divisibility).
    * B  > 512: tiles of up to 1024 rows, rounded to a multiple of 256, chosen
      so there are at least 2 grid steps (v7x dual-TensorCore sharding) while
      still amortizing the ~0.35us fixed per-step pipeline overhead.
    """
    if B <= 512:
        return B
    half = -(-B // 2)                       # ceil(B / 2)
    return min(1024, -(-half // 256) * 256)  # round up to 256, cap at 1024


@jax.jit
def mlp_forward(x, prepared):
    """x: (B, 60) float32, prepared = prepare_params(...)  ->  (B, 11) float32."""
    w1, b1, w2, b2, w3, b3, w4, b4 = prepared
    B = x.shape[0]
    tb = _choose_tb(B)
    n_tiles = pl.cdiv(B, tb)

    work_rows = n_tiles * tb
    flops = 2 * work_rows * (IN_FEATURES * HIDDEN
                             + 2 * HIDDEN * HIDDEN
                             + HIDDEN * N_OUT_PAD)
    bytes_accessed = (
        B * IN_FEATURES * 4                               # x (f32)
        + B * N_OUT_PAD * 2                               # out (bf16)
        + (IN_FEATURES * HIDDEN + 2 * HIDDEN * HIDDEN
           + HIDDEN * N_OUT_PAD) * 2                      # weights (bf16)
        + (3 * HIDDEN + N_OUT_PAD) * 4)                   # biases (f32)

    resident = lambda i: (0, 0)     # weights/biases: same block every step
    batch_tile = lambda i: (i, 0)   # x/out: tile over batch

    out_padded = pl.pallas_call(
        mlp_kernel,
        out_shape=jax.ShapeDtypeStruct((B, N_OUT_PAD), jnp.bfloat16),
        grid_spec=pltpu.PrefetchScalarGridSpec(
            num_scalar_prefetch=0,
            grid=(n_tiles,),
            in_specs=[
                pl.BlockSpec((tb, IN_FEATURES), batch_tile),
                pl.BlockSpec((IN_FEATURES, HIDDEN), resident),
                pl.BlockSpec((1, HIDDEN), resident),
                pl.BlockSpec((HIDDEN, HIDDEN), resident),
                pl.BlockSpec((1, HIDDEN), resident),
                pl.BlockSpec((HIDDEN, HIDDEN), resident),
                pl.BlockSpec((1, HIDDEN), resident),
                pl.BlockSpec((HIDDEN, N_OUT_PAD), resident),
                pl.BlockSpec((1, N_OUT_PAD), resident),
            ],
            out_specs=pl.BlockSpec((tb, N_OUT_PAD), batch_tile),
        ),
        compiler_params=pltpu.CompilerParams(
            dimension_semantics=("parallel",),
            vmem_limit_bytes=32 * 1024 * 1024),
        cost_estimate=pl.CostEstimate(
            flops=flops, transcendentals=0, bytes_accessed=bytes_accessed),
    )(x, w1, b1, w2, b2, w3, b3, w4, b4)

    # Tiny column slice of the lane-dense padded output; cast back to f32 last.
    return out_padded[:, :OUT_FEATURES].astype(jnp.float32)


def init_params(key):
    """Deterministic init mimicking nn.Linear defaults (uniform +/- 1/sqrt(fan_in)).

    Weights are stored as (in_features, out_features) — transpose of PyTorch's
    (out, in) layout — so the kernel computes y = x @ W + b directly.
    """
    dims = [(60, 256), (256, 256), (256, 256), (256, 11)]
    params = []
    for fan_in, fan_out in dims:
        key, kw, kb = jax.random.split(key, 3)
        bound = 1.0 / jnp.sqrt(jnp.float32(fan_in))
        w = jax.random.uniform(kw, (fan_in, fan_out), jnp.float32, -bound, bound)
        b = jax.random.uniform(kb, (1, fan_out), jnp.float32, -bound, bound)
        params.append((w, b))
    return params


def reference_forward(x, params):
    h = x
    for i, (w, b) in enumerate(params):
        h = h @ w + b
        if i < 3:
            h = jnp.maximum(h, 0.0)
    return h


if __name__ == "__main__":
    key = jax.random.PRNGKey(0)
    kx, kp = jax.random.split(key)

    params = init_params(kp)
    prepared = prepare_params(params)  # one-time prep, outside the hot path

    # B=8: single tile.  B=600: two tiles (tb=512) with a partial last tile,
    # exercising the batch index_map, masked overhang rows, and megacore path.
    for B in (8, 600):
        xb = jax.random.normal(jax.random.fold_in(kx, B), (B, 60), jnp.float32)
        out = jax.block_until_ready(mlp_forward(xb, prepared))
        ref = reference_forward(xb, params)
        assert out.shape == (B, 11), out.shape
        # bf16 matmul operands with f32 accumulation -> looser tolerance.
        assert jnp.allclose(out, ref, atol=3e-2, rtol=3e-2), (
            B, float(jnp.max(jnp.abs(out - ref))))

    print("KERNEL_OK")
</pallas_src>

<mosaic_0001>
module attributes {stable_mosaic.version = 11 : i64} {
  func.func @mlp_kernel(%arg0: i32, %arg1: memref<8x60xf32, #tpu.memory_space<vmem>>, %arg2: memref<60x256xbf16, #tpu.memory_space<vmem>>, %arg3: memref<1x256xf32, #tpu.memory_space<vmem>>, %arg4: memref<256x256xbf16, #tpu.memory_space<vmem>>, %arg5: memref<1x256xf32, #tpu.memory_space<vmem>>, %arg6: memref<256x256xbf16, #tpu.memory_space<vmem>>, %arg7: memref<1x256xf32, #tpu.memory_space<vmem>>, %arg8: memref<256x128xbf16, #tpu.memory_space<vmem>>, %arg9: memref<1x128xf32, #tpu.memory_space<vmem>>, %arg10: memref<8x128xbf16, #tpu.memory_space<vmem>>) attributes {dimension_semantics = [#tpu.dimension_semantics<parallel>], iteration_bounds = array<i64: 1>, scalar_prefetch = 0 : i64, scratch_operands = 0 : i64, tpu.core_type = #tpu.core_type<tc>, window_params = [{transform_indices = @transform_0, window_bounds = array<i64: 8, 60>}, {pipeline_mode = #tpu.pipeline_mode<synchronous>, transform_indices = @transform_1, window_bounds = array<i64: 60, 256>}, {pipeline_mode = #tpu.pipeline_mode<synchronous>, transform_indices = @transform_2, window_bounds = array<i64: 1, 256>}, {pipeline_mode = #tpu.pipeline_mode<synchronous>, transform_indices = @transform_3, window_bounds = array<i64: 256, 256>}, {pipeline_mode = #tpu.pipeline_mode<synchronous>, transform_indices = @transform_4, window_bounds = array<i64: 1, 256>}, {pipeline_mode = #tpu.pipeline_mode<synchronous>, transform_indices = @transform_5, window_bounds = array<i64: 256, 256>}, {pipeline_mode = #tpu.pipeline_mode<synchronous>, transform_indices = @transform_6, window_bounds = array<i64: 1, 256>}, {pipeline_mode = #tpu.pipeline_mode<synchronous>, transform_indices = @transform_7, window_bounds = array<i64: 256, 128>}, {pipeline_mode = #tpu.pipeline_mode<synchronous>, transform_indices = @transform_8, window_bounds = array<i64: 1, 128>}, {transform_indices = @transform_9, window_bounds = array<i64: 8, 128>}]} {
    %c0 = arith.constant 0 : index
    %c0_0 = arith.constant 0 : index
    %0 = vector.load %arg1[%c0, %c0_0] : memref<8x60xf32, #tpu.memory_space<vmem>>, vector<8x60xf32>
    %1 = arith.truncf %0 : vector<8x60xf32> to vector<8x60xbf16>
    %c0_1 = arith.constant 0 : index
    %c0_2 = arith.constant 0 : index
    %2 = vector.load %arg2[%c0_1, %c0_2] : memref<60x256xbf16, #tpu.memory_space<vmem>>, vector<60x256xbf16>
    %cst = arith.constant dense<0.000000e+00> : vector<8x256xf32>
    %3 = tpu.matmul %1, %2, %cst {dimension_numbers = #tpu.dot_dimension_numbers<[1], [0], [0], [1], [0, 0, 1, 1], [], []>} : vector<8x60xbf16>, vector<60x256xbf16>, vector<8x256xf32> -> vector<8x256xf32>
    %c0_3 = arith.constant 0 : index
    %c0_4 = arith.constant 0 : index
    %4 = vector.load %arg3[%c0_3, %c0_4] : memref<1x256xf32, #tpu.memory_space<vmem>>, vector<1x256xf32>
    %5 = vector.broadcast %4 : vector<1x256xf32> to vector<8x256xf32>
    %6 = arith.addf %3, %5 : vector<8x256xf32>
    %cst_5 = arith.constant 0.000000e+00 : f32
    %7 = vector.broadcast %cst_5 : f32 to vector<8x256xf32>
    %8 = arith.maximumf %6, %7 : vector<8x256xf32>
    %9 = arith.truncf %8 : vector<8x256xf32> to vector<8x256xbf16>
    %c0_6 = arith.constant 0 : index
    %c0_7 = arith.constant 0 : index
    %10 = vector.load %arg4[%c0_6, %c0_7] : memref<256x256xbf16, #tpu.memory_space<vmem>>, vector<256x256xbf16>
    %cst_8 = arith.constant dense<0.000000e+00> : vector<8x256xf32>
    %11 = tpu.matmul %9, %10, %cst_8 {dimension_numbers = #tpu.dot_dimension_numbers<[1], [0], [0], [1], [0, 0, 1, 1], [], []>} : vector<8x256xbf16>, vector<256x256xbf16>, vector<8x256xf32> -> vector<8x256xf32>
    %c0_9 = arith.constant 0 : index
    %c0_10 = arith.constant 0 : index
    %12 = vector.load %arg5[%c0_9, %c0_10] : memref<1x256xf32, #tpu.memory_space<vmem>>, vector<1x256xf32>
    %13 = vector.broadcast %12 : vector<1x256xf32> to vector<8x256xf32>
    %14 = arith.addf %11, %13 : vector<8x256xf32>
    %cst_11 = arith.constant 0.000000e+00 : f32
    %15 = vector.broadcast %cst_11 : f32 to vector<8x256xf32>
    %16 = arith.maximumf %14, %15 : vector<8x256xf32>
    %17 = arith.truncf %16 : vector<8x256xf32> to vector<8x256xbf16>
    %c0_12 = arith.constant 0 : index
    %c0_13 = arith.constant 0 : index
    %18 = vector.load %arg6[%c0_12, %c0_13] : memref<256x256xbf16, #tpu.memory_space<vmem>>, vector<256x256xbf16>
    %cst_14 = arith.constant dense<0.000000e+00> : vector<8x256xf32>
    %19 = tpu.matmul %17, %18, %cst_14 {dimension_numbers = #tpu.dot_dimension_numbers<[1], [0], [0], [1], [0, 0, 1, 1], [], []>} : vector<8x256xbf16>, vector<256x256xbf16>, vector<8x256xf32> -> vector<8x256xf32>
    %c0_15 = arith.constant 0 : index
    %c0_16 = arith.constant 0 : index
    %20 = vector.load %arg7[%c0_15, %c0_16] : memref<1x256xf32, #tpu.memory_space<vmem>>, vector<1x256xf32>
    %21 = vector.broadcast %20 : vector<1x256xf32> to vector<8x256xf32>
    %22 = arith.addf %19, %21 : vector<8x256xf32>
    %cst_17 = arith.constant 0.000000e+00 : f32
    %23 = vector.broadcast %cst_17 : f32 to vector<8x256xf32>
    %24 = arith.maximumf %22, %23 : vector<8x256xf32>
    %25 = arith.truncf %24 : vector<8x256xf32> to vector<8x256xbf16>
    %c0_18 = arith.constant 0 : index
    %c0_19 = arith.constant 0 : index
    %26 = vector.load %arg8[%c0_18, %c0_19] : memref<256x128xbf16, #tpu.memory_space<vmem>>, vector<256x128xbf16>
    %cst_20 = arith.constant dense<0.000000e+00> : vector<8x128xf32>
    %27 = tpu.matmul %25, %26, %cst_20 {dimension_numbers = #tpu.dot_dimension_numbers<[1], [0], [0], [1], [0, 0, 1, 1], [], []>} : vector<8x256xbf16>, vector<256x128xbf16>, vector<8x128xf32> -> vector<8x128xf32>
    %c0_21 = arith.constant 0 : index
    %c0_22 = arith.constant 0 : index
    %28 = vector.load %arg9[%c0_21, %c0_22] : memref<1x128xf32, #tpu.memory_space<vmem>>, vector<1x128xf32>
    %29 = vector.broadcast %28 : vector<1x128xf32> to vector<8x128xf32>
    %30 = arith.addf %27, %29 : vector<8x128xf32>
    %31 = arith.truncf %30 : vector<8x128xf32> to vector<8x128xbf16>
    %c0_23 = arith.constant 0 : index
    %c0_24 = arith.constant 0 : index
    %32 = vector.load %arg10[%c0_23, %c0_24] : memref<8x128xbf16, #tpu.memory_space<vmem>>, vector<8x128xbf16>
    tpu.vector_store %arg10[%c0_23, %c0_24], %31 {strides = array<i32>} : memref<8x128xbf16, #tpu.memory_space<vmem>>, vector<8x128xbf16>,
    return
  }
  func.func @transform_0(%arg0: i32) -> (i32, i32) {
    %c0_i32 = arith.constant 0 : i32
    %c0_i32_0 = arith.constant 0 : i32
    return %arg0, %c0_i32 : i32, i32
  }
  func.func @transform_1(%arg0: i32) -> (i32, i32) {
    %c0_i32 = arith.constant 0 : i32
    %c0_i32_0 = arith.constant 0 : i32
    %c0_i32_1 = arith.constant 0 : i32
    return %c0_i32, %c0_i32_0 : i32, i32
  }
  func.func @transform_2(%arg0: i32) -> (i32, i32) {
    %c0_i32 = arith.constant 0 : i32
    %c0_i32_0 = arith.constant 0 : i32
    %c0_i32_1 = arith.constant 0 : i32
    return %c0_i32, %c0_i32_0 : i32, i32
  }
  func.func @transform_3(%arg0: i32) -> (i32, i32) {
    %c0_i32 = arith.constant 0 : i32
    %c0_i32_0 = arith.constant 0 : i32
    %c0_i32_1 = arith.constant 0 : i32
    return %c0_i32, %c0_i32_0 : i32, i32
  }
  func.func @transform_4(%arg0: i32) -> (i32, i32) {
    %c0_i32 = arith.constant 0 : i32
    %c0_i32_0 = arith.constant 0 : i32
    %c0_i32_1 = arith.constant 0 : i32
    return %c0_i32, %c0_i32_0 : i32, i32
  }
  func.func @transform_5(%arg0: i32) -> (i32, i32) {
    %c0_i32 = arith.constant 0 : i32
    %c0_i32_0 = arith.constant 0 : i32
    %c0_i32_1 = arith.constant 0 : i32
    return %c0_i32, %c0_i32_0 : i32, i32
  }
  func.func @transform_6(%arg0: i32) -> (i32, i32) {
    %c0_i32 = arith.constant 0 : i32
    %c0_i32_0 = arith.constant 0 : i32
    %c0_i32_1 = arith.constant 0 : i32
    return %c0_i32, %c0_i32_0 : i32, i32
  }
  func.func @transform_7(%arg0: i32) -> (i32, i32) {
    %c0_i32 = arith.constant 0 : i32
    %c0_i32_0 = arith.constant 0 : i32
    %c0_i32_1 = arith.constant 0 : i32
    return %c0_i32, %c0_i32_0 : i32, i32
  }
  func.func @transform_8(%arg0: i32) -> (i32, i32) {
    %c0_i32 = arith.constant 0 : i32
    %c0_i32_0 = arith.constant 0 : i32
    %c0_i32_1 = arith.constant 0 : i32
    return %c0_i32, %c0_i32_0 : i32, i32
  }
  func.func @transform_9(%arg0: i32) -> (i32, i32) {
    %c0_i32 = arith.constant 0 : i32
    %c0_i32_0 = arith.constant 0 : i32
    return %arg0, %c0_i32 : i32, i32
  }
}

</mosaic_0001>

<llo_original>
// kernel: mlp_forward.1
$region0: #{mlp_forward.1}
  #allocation0 [shape = 'u32[]', space=smem, size = 0x4, offset = 0x4, fixed_abs, tag = 'smem constant byte address 0x4 - core index']
  #allocation1 [shape = 'u32[144,128]{1,0:T(1,128)}', space=vmem, size = 0x12000, scoped, tag = 'internal scratch']
  %s0 = inlined_call_operand.hbm [shape: f32[8,60], index: 0, kind: input, shape index: {}]
  %s1 = inlined_call_operand.hbm [shape: bf16[60,256], index: 1, kind: input, shape index: {}]
  %s2 = inlined_call_operand.vmem [shape: f32[1,256], index: 2, kind: input, shape index: {}]
  %s3 = inlined_call_operand.hbm [shape: bf16[256,256], index: 3, kind: input, shape index: {}]
  %s4 = inlined_call_operand.vmem [shape: f32[1,256], index: 4, kind: input, shape index: {}]
  %s5 = inlined_call_operand.hbm [shape: bf16[256,256], index: 5, kind: input, shape index: {}]
  %s6 = inlined_call_operand.vmem [shape: f32[1,256], index: 6, kind: input, shape index: {}]
  %s7 = inlined_call_operand.hbm [shape: bf16[256,128], index: 7, kind: input, shape index: {}]
  %s8 = inlined_call_operand.vmem [shape: f32[1,128], index: 8, kind: input, shape index: {}]
  %s9 = inlined_call_operand.vmem [shape: bf16[8,128], index: 9, kind: output, shape index: {}]
  %s10 = sld [smem:[#allocation0]]
  $region66: #{mlp_forward.1} parent=0
    _
  %s12 = ssub.s32 1, %s10
  %s13 = scalar_select 0, %s12, %s10
  $region1: #{mlp_forward.1} parent=0
    #allocation2 [shape = 'u8[4096]{0}', space=vmem, size = 0x1000, scoped, tag = 'input window, operand 0, single buffered']
    #allocation3 [shape = 's32[1]{0}', space=sflag, size = 0x4, scoped, tag = 'scoped memory for mlp_forward.1']
    #allocation4 [shape = 'u8[32768]{0}', space=vmem, size = 0x8000, scoped, tag = 'input window, operand 1, single buffered']
    #allocation5 [shape = 's32[1]{0}', space=sflag, size = 0x4, scoped, tag = 'scoped memory for mlp_forward.1']
    #allocation6 [shape = 'u8[131072]{0}', space=vmem, size = 0x20000, scoped, tag = 'input window, operand 3, single buffered']
    #allocation7 [shape = 'u8[131072]{0}', space=vmem, size = 0x20000, scoped, tag = 'input window, operand 5, single buffered']
    #allocation8 [shape = 's32[1]{0}', space=sflag, size = 0x4, scoped, tag = 'scoped memory for mlp_forward.1']
    #allocation9 [shape = 'u8[65536]{0}', space=vmem, size = 0x10000, scoped, tag = 'input window, operand 7, single buffered']
    %14 = vsyncpa [#allocation3], 0
    %15 = vsyncpa [#allocation5], 0
    %16 = vsyncpa [#allocation8], 0
    // Predicated region
    $region2: #{mlp_forward.1} parent=1 // pred_check
      _
    $region3: #{mlp_forward.1} parent=1 // pred_check_branch
      %18 = sbr.rel (0) target = $region5
    $region4: #{mlp_forward.1} parent=1 // pred_region
      %s20 = ssub.s32 128, 128
      %21 = vsyncadd [#allocation3], %s20
      %s23 = sshll.u32 [#allocation2], 4
      %s24 = int_to_ptr.vmem [resolvable:$true] %s23
      %26 = dma.hbm_to_vmem [thread:$0]  %s0, 128, %s24, [#allocation3]
    $region5: #{mlp_forward.1} parent=1 // pred_fallthru
      _
    // Predicated region
    $region6: #{mlp_forward.1} parent=1 // pred_check
      _
    $region7: #{mlp_forward.1} parent=1 // pred_check_branch
      %28 = sbr.rel (0) target = $region9
    $region8: #{mlp_forward.1} parent=1 // pred_region
      %s30 = ssub.s32 1024, 1024
      %31 = vsyncadd [#allocation5], %s30
      %s32 = sshll.u32 [#allocation4], 4
      %s33 = int_to_ptr.vmem [resolvable:$true] %s32
      %38 = dma.hbm_to_vmem [thread:$0]  %s1, 1024, %s33, [#allocation5], 128, 128, 8
    $region9: #{mlp_forward.1} parent=1 // pred_fallthru
      _
    // Predicated region
    $region10: #{mlp_forward.1} parent=1 // pred_check
      _
    $region11: #{mlp_forward.1} parent=1 // pred_check_branch
      %40 = sbr.rel (0) target = $region13
    $region12: #{mlp_forward.1} parent=1 // pred_region
      _
    $region13: #{mlp_forward.1} parent=1 // pred_fallthru
      _
    // Predicated region
    $region14: #{mlp_forward.1} parent=1 // pred_check
      _
    $region15: #{mlp_forward.1} parent=1 // pred_check_branch
      %42 = sbr.rel (0) target = $region17
    $region16: #{mlp_forward.1} parent=1 // pred_region
      %s44 = ssub.s32 4096, 4096
      %45 = vsyncadd [#allocation5], %s44
      %s46 = sshll.u32 [#allocation6], 4
      %s47 = int_to_ptr.vmem [resolvable:$true] %s46
      %52 = dma.hbm_to_vmem [thread:$0]  %s3, 4096, %s47, [#allocation5], 128, 128, 8
    $region17: #{mlp_forward.1} parent=1 // pred_fallthru
      _
    // Predicated region
    $region18: #{mlp_forward.1} parent=1 // pred_check
      _
    $region19: #{mlp_forward.1} parent=1 // pred_check_branch
      %54 = sbr.rel (0) target = $region21
    $region20: #{mlp_forward.1} parent=1 // pred_region
      _
    $region21: #{mlp_forward.1} parent=1 // pred_fallthru
      _
    // Predicated region
    $region22: #{mlp_forward.1} parent=1 // pred_check
      _
    $region23: #{mlp_forward.1} parent=1 // pred_check_branch
      %56 = sbr.rel (0) target = $region25
    $region24: #{mlp_forward.1} parent=1 // pred_region
      %s58 = ssub.s32 4096, 4096
      %59 = vsyncadd [#allocation8], %s58
      %s60 = sshll.u32 [#allocation7], 4
      %s61 = int_to_ptr.vmem [resolvable:$true] %s60
      %66 = dma.hbm_to_vmem [thread:$0]  %s5, 4096, %s61, [#allocation8], 128, 128, 8
    $region25: #{mlp_forward.1} parent=1 // pred_fallthru
      _
    // Predicated region
    $region26: #{mlp_forward.1} parent=1 // pred_check
      _
    $region27: #{mlp_forward.1} parent=1 // pred_check_branch
      %68 = sbr.rel (0) target = $region29
    $region28: #{mlp_forward.1} parent=1 // pred_region
      _
    $region29: #{mlp_forward.1} parent=1 // pred_fallthru
      _
    // Predicated region
    $region30: #{mlp_forward.1} parent=1 // pred_check
      _
    $region31: #{mlp_forward.1} parent=1 // pred_check_branch
      %70 = sbr.rel (0) target = $region33
    $region32: #{mlp_forward.1} parent=1 // pred_region
      %s72 = ssub.s32 2048, 2048
      %73 = vsyncadd [#allocation8], %s72
      %s74 = sshll.u32 [#allocation9], 4
      %s75 = int_to_ptr.vmem [resolvable:$true] %s74
      %80 = dma.hbm_to_vmem [thread:$0]  %s7, 2048, %s75, [#allocation8], 64, 64, 4
    $region33: #{mlp_forward.1} parent=1 // pred_fallthru
      _
    // Predicated region
    $region34: #{mlp_forward.1} parent=1 // pred_check
      _
    $region35: #{mlp_forward.1} parent=1 // pred_check_branch
      %82 = sbr.rel (0) target = $region37
    $region36: #{mlp_forward.1} parent=1 // pred_region
      _
    $region37: #{mlp_forward.1} parent=1 // pred_fallthru
      _
    // Predicated region
    $region38: #{mlp_forward.1} parent=1 // pred_check
      _
    $region39: #{mlp_forward.1} parent=1 // pred_check_branch
      %84 = sbr.rel (0) target = $region41
    $region40: #{mlp_forward.1} parent=1 // pred_region
      %85 = dma.done [#allocation3], 128
    $region41: #{mlp_forward.1} parent=1 // pred_fallthru
      _
    // Predicated region
    $region42: #{mlp_forward.1} parent=1 // pred_check
      _
    $region43: #{mlp_forward.1} parent=1 // pred_check_branch
      %87 = sbr.rel (0) target = $region45
    $region44: #{mlp_forward.1} parent=1 // pred_region
      %88 = dma.done [#allocation5], 1024
    $region45: #{mlp_forward.1} parent=1 // pred_fallthru
      _
    // Predicated region
    $region46: #{mlp_forward.1} parent=1 // pred_check
      _
    $region47: #{mlp_forward.1} parent=1 // pred_check_branch
      %90 = sbr.rel (0) target = $region49
    $region48: #{mlp_forward.1} parent=1 // pred_region
      %91 = dma.done [#allocation5], 4096
    $region49: #{mlp_forward.1} parent=1 // pred_fallthru
      _
    // Predicated region
    $region50: #{mlp_forward.1} parent=1 // pred_check
      _
    $region51: #{mlp_forward.1} parent=1 // pred_check_branch
      %93 = sbr.rel (0) target = $region53
    $region52: #{mlp_forward.1} parent=1 // pred_region
      %94 = dma.done [#allocation8], 4096
    $region53: #{mlp_forward.1} parent=1 // pred_fallthru
      _
    // Predicated region
    $region54: #{mlp_forward.1} parent=1 // pred_check
      _
    $region55: #{mlp_forward.1} parent=1 // pred_check_branch
      %96 = sbr.rel (0) target = $region57
    $region56: #{mlp_forward.1} parent=1 // pred_region
      %97 = dma.done [#allocation8], 2048
    $region57: #{mlp_forward.1} parent=1 // pred_fallthru
      _
    %v99 = vld [vmem:[#allocation2] sm:$0xff]
    %v100 = vpack.c.bf16 %v99, %v99
    %v101 = vld [vmem:[#allocation4] sm:$0xff]
    %v102 = vld [vmem:[#allocation4 + $0x8] sm:$0xff]
    %v103 = vld [vmem:[#allocation4 + $0x10] sm:$0xff]
    %v104 = vld [vmem:[#allocation4 + $0x18] sm:$0xff]
    %v105 = vld [vmem:[#allocation4 + $0x20] sm:$0xff]
    %v106 = vld [vmem:[#allocation4 + $0x28] sm:$0xff]
    %v107 = vld [vmem:[#allocation4 + $0x30] sm:$0xff]
    %v108 = vld [vmem:[#allocation4 + $0x38] sm:$0x33]
    %v109 = vld [vmem:[%s2] sm:$0x3]
    %v111 = vlaneseq
    %v112 = vshrl.u32 %v111, 7
    %v113 = vsub.s32 0, %v112
    %v114 = vrot.slane %v109, %v113
    %v115 = vlaneseq
    %v116 = vshrl.u32 %v115, 7
    %v117 = vsub.s32 1, %v116
    %v118 = vrot.slane %v109, %v117
    %v129 = vunpack.c.l.b16 %v101
    %v130 = vunpack.c.h.b16 %v101
    %v131 = vunpack.c.l.b16 %v102
    %v132 = vunpack.c.h.b16 %v102
    %v133 = vunpack.c.l.b16 %v103
    %v134 = vunpack.c.h.b16 %v103
    %v135 = vunpack.c.l.b16 %v104
    %v136 = vunpack.c.h.b16 %v104
    %v137 = vunpack.c.l.b16 %v105
    %v138 = vunpack.c.h.b16 %v105
    %v139 = vunpack.c.l.b16 %v106
    %v140 = vunpack.c.h.b16 %v106
    %v141 = vunpack.c.l.b16 %v107
    %v142 = vunpack.c.h.b16 %v107
    %v143 = vunpack.c.l.b16 %v108
    %v144 = vunpack.c.h.b16 %v108
    %v145 = vpack.c.b16 %v131, %v129
    %v146 = vpack.c.b16 %v132, %v130
    %v147 = vpack.c.b16 %v135, %v133
    %v148 = vpack.c.b16 %v136, %v134
    %v149 = vpack.c.b16 %v139, %v137
    %v150 = vpack.c.b16 %v140, %v138
    %v151 = vpack.c.b16 %v143, %v141
    %v152 = vpack.c.b16 %v144, %v142
    %vm159 = vcmask 490496
    %v161 = vsel %vm159, %v100, 0
    %vm163 = vcmask 1045504
    %v165 = vsel %vm163, %v151, 0
    %v168 = vsel %vm163, %v152, 0
    %170 = vmatprep.subr.bf16.mxu0 %v146
    %171 = vmatpush1.bf16.msra.mxu0 %v145
    %172 = vmatprep.subr.bf16.mxu0 %v148
    %173 = vmatpush1.bf16.msra.mxu0 %v147
    %174 = vmatprep.subr.bf16.mxu0 %v150
    %175 = vmatpush1.bf16.msra.mxu0 %v149
    %176 = vmatprep.subr.bf16.mxu0 %v168
    %177 = vmatpush1.bf16.msra.mxu0 %v165
    %178 = vmatprep.subr.bf16.mxu0 0
    %179 = vmatpush1.bf16.msra.mxu0 0
    %180 = vmatprep.subr.bf16.mxu0 0
    %181 = vmatpush1.bf16.msra.mxu0 0
    %182 = vmatprep.subr.bf16.mxu0 0
    %183 = vmatpush1.bf16.msra.mxu0 0
    %184 = vmatprep.subr.bf16.mxu0 0
    %185 = vmatpush1.bf16.msra.mxu0 0
    %186 = vmatprep.subr.bf16.mxu0 0
    %187 = vmatpush1.bf16.msra.mxu0 0
    %188 = vmatprep.subr.bf16.mxu0 0
    %189 = vmatpush1.bf16.msra.mxu0 0
    %190 = vmatprep.subr.bf16.mxu0 0
    %191 = vmatpush1.bf16.msra.mxu0 0
    %192 = vmatprep.subr.bf16.mxu0 0
    %193 = vmatpush1.bf16.msra.mxu0 0
    %194 = vmatprep.subr.bf16.mxu0 0
    %195 = vmatpush1.bf16.msra.mxu0 0
    %196 = vmatprep.subr.bf16.mxu0 0
    %197 = vmatpush1.bf16.msra.mxu0 0
    %198 = vmatprep.subr.bf16.mxu0 0
    %199 = vmatpush1.bf16.msra.mxu0 0
    %200 = vmatprep.subr.bf16.mxu0 0
    %201 = vmatpush1.bf16.msra.mxu0 0
    %202 = vmatprep.mubr.bf16.mxu0 0
    %203 = vmatmul.mubr.bf16.gmra.mrb[0].mxu0 %v161
    %v204 = vpop.f32.mrb[0].mxu0
    %v205 = vadd.f32 %v114, %v204
    %v206 = vpop.f32.mrb[0].mxu0
    %v207 = vadd.f32 %v118, %v206
    %v208 = vpop.f32.mrb[0].mxu0
    %v209 = vpop.f32.mrb[0].mxu0
    %210 = vdwg.mxu0
    %v211 = vmax.f32 %v205, 0.0
    %v212 = vmax.f32 %v207, 0.0
    %v213 = vpack.c.bf16 %v211, %v211
    %v214 = vpack.c.bf16 %v212, %v212
    %v215 = vld [vmem:[#allocation6] sm:$0xff]
    %v216 = vld [vmem:[#allocation6 + $0x8] sm:$0xff]
    %v217 = vld [vmem:[#allocation6 + $0x10] sm:$0xff]
    %v218 = vld [vmem:[#allocation6 + $0x18] sm:$0xff]
    %v219 = vld [vmem:[#allocation6 + $0x20] sm:$0xff]
    %v220 = vld [vmem:[#allocation6 + $0x28] sm:$0xff]
    %v221 = vld [vmem:[#allocation6 + $0x30] sm:$0xff]
    %v222 = vld [vmem:[#allocation6 + $0x38] sm:$0xff]
    %v223 = vld [vmem:[#allocation6 + $0x40] sm:$0xff]
    %v224 = vld [vmem:[#allocation6 + $0x48] sm:$0xff]
    %v225 = vld [vmem:[#allocation6 + $0x50] sm:$0xff]
    %v226 = vld [vmem:[#allocation6 + $0x58] sm:$0xff]
    %v227 = vld [vmem:[#allocation6 + $0x60] sm:$0xff]
    %v228 = vld [vmem:[#allocation6 + $0x68] sm:$0xff]
    %v229 = vld [vmem:[#allocation6 + $0x70] sm:$0xff]
    %v230 = vld [vmem:[#allocation6 + $0x78] sm:$0xff]
    %v231 = vld [vmem:[#allocation6 + $0x80] sm:$0xff]
    %v232 = vld [vmem:[#allocation6 + $0x88] sm:$0xff]
    %v233 = vld [vmem:[#allocation6 + $0x90] sm:$0xff]
    %v234 = vld [vmem:[#allocation6 + $0x98] sm:$0xff]
    %v235 = vld [vmem:[#allocation6 + $0xa0] sm:$0xff]
    %v236 = vld [vmem:[#allocation6 + $0xa8] sm:$0xff]
    %v237 = vld [vmem:[#allocation6 + $0xb0] sm:$0xff]
    %v238 = vld [vmem:[#allocation6 + $0xb8] sm:$0xff]
    %v239 = vld [vmem:[#allocation6 + $0xc0] sm:$0xff]
    %v240 = vld [vmem:[#allocation6 + $0xc8] sm:$0xff]
    %v241 = vld [vmem:[#allocation6 + $0xd0] sm:$0xff]
    %v242 = vld [vmem:[#allocation6 + $0xd8] sm:$0xff]
    %v243 = vld [vmem:[#allocation6 + $0xe0] sm:$0xff]
    %v244 = vld [vmem:[#allocation6 + $0xe8] sm:$0xff]
    %v245 = vld [vmem:[#allocation6 + $0xf0] sm:$0xff]
    %v246 = vld [vmem:[#allocation6 + $0xf8] sm:$0xff]
    %v247 = vld [vmem:[%s4] sm:$0x3]
    %v249 = vlaneseq
    %v250 = vshrl.u32 %v249, 7
    %v251 = vsub.s32 0, %v250
    %v252 = vrot.slane %v247, %v251
    %v253 = vlaneseq
    %v254 = vshrl.u32 %v253, 7
    %v255 = vsub.s32 1, %v254
    %v256 = vrot.slane %v247, %v255
    %v291 = vunpack.c.l.b16 %v215
    %v292 = vunpack.c.h.b16 %v215
    %v293 = vunpack.c.l.b16 %v216
    %v294 = vunpack.c.h.b16 %v216
    %v295 = vunpack.c.l.b16 %v217
    %v296 = vunpack.c.h.b16 %v217
    %v297 = vunpack.c.l.b16 %v218
    %v298 = vunpack.c.h.b16 %v218
    %v299 = vunpack.c.l.b16 %v219
    %v300 = vunpack.c.h.b16 %v219
    %v301 = vunpack.c.l.b16 %v220
    %v302 = vunpack.c.h.b16 %v220
    %v303 = vunpack.c.l.b16 %v221
    %v304 = vunpack.c.h.b16 %v221
    %v305 = vunpack.c.l.b16 %v222
    %v306 = vunpack.c.h.b16 %v222
    %v307 = vunpack.c.l.b16 %v223
    %v308 = vunpack.c.h.b16 %v223
    %v309 = vunpack.c.l.b16 %v224
    %v310 = vunpack.c.h.b16 %v224
    %v311 = vunpack.c.l.b16 %v225
    %v312 = vunpack.c.h.b16 %v225
    %v313 = vunpack.c.l.b16 %v226
    %v314 = vunpack.c.h.b16 %v226
    %v315 = vunpack.c.l.b16 %v227
    %v316 = vunpack.c.h.b16 %v227
    %v317 = vunpack.c.l.b16 %v228
    %v318 = vunpack.c.h.b16 %v228
    %v319 = vunpack.c.l.b16 %v229
    %v320 = vunpack.c.h.b16 %v229
    %v321 = vunpack.c.l.b16 %v230
    %v322 = vunpack.c.h.b16 %v230
    %v323 = vunpack.c.l.b16 %v231
    %v324 = vunpack.c.h.b16 %v231
    %v325 = vunpack.c.l.b16 %v232
    %v326 = vunpack.c.h.b16 %v232
    %v327 = vunpack.c.l.b16 %v233
    %v328 = vunpack.c.h.b16 %v233
    %v329 = vunpack.c.l.b16 %v234
    %v330 = vunpack.c.h.b16 %v234
    %v331 = vunpack.c.l.b16 %v235
    %v332 = vunpack.c.h.b16 %v235
    %v333 = vunpack.c.l.b16 %v236
    %v334 = vunpack.c.h.b16 %v236
    %v335 = vunpack.c.l.b16 %v237
    %v336 = vunpack.c.h.b16 %v237
    %v337 = vunpack.c.l.b16 %v238
    %v338 = vunpack.c.h.b16 %v238
    %v339 = vunpack.c.l.b16 %v239
    %v340 = vunpack.c.h.b16 %v239
    %v341 = vunpack.c.l.b16 %v240
    %v342 = vunpack.c.h.b16 %v240
    %v343 = vunpack.c.l.b16 %v241
    %v344 = vunpack.c.h.b16 %v241
    %v345 = vunpack.c.l.b16 %v242
    %v346 = vunpack.c.h.b16 %v242
    %v347 = vunpack.c.l.b16 %v243
    %v348 = vunpack.c.h.b16 %v243
    %v349 = vunpack.c.l.b16 %v244
    %v350 = vunpack.c.h.b16 %v244
    %v351 = vunpack.c.l.b16 %v245
    %v352 = vunpack.c.h.b16 %v245
    %v353 = vunpack.c.l.b16 %v246
    %v354 = vunpack.c.h.b16 %v246
    %v355 = vpack.c.b16 %v293, %v291
    %v356 = vpack.c.b16 %v294, %v292
    %v357 = vpack.c.b16 %v297, %v295
    %v358 = vpack.c.b16 %v298, %v296
    %v359 = vpack.c.b16 %v301, %v299
    %v360 = vpack.c.b16 %v302, %v300
    %v361 = vpack.c.b16 %v305, %v303
    %v362 = vpack.c.b16 %v306, %v304
    %v363 = vpack.c.b16 %v309, %v307
    %v364 = vpack.c.b16 %v310, %v308
    %v365 = vpack.c.b16 %v313, %v311
    %v366 = vpack.c.b16 %v314, %v312
    %v367 = vpack.c.b16 %v317, %v315
    %v368 = vpack.c.b16 %v318, %v316
    %v369 = vpack.c.b16 %v321, %v319
    %v370 = vpack.c.b16 %v322, %v320
    %v371 = vpack.c.b16 %v325, %v323
    %v372 = vpack.c.b16 %v326, %v324
    %v373 = vpack.c.b16 %v329, %v327
    %v374 = vpack.c.b16 %v330, %v328
    %v375 = vpack.c.b16 %v333, %v331
    %v376 = vpack.c.b16 %v334, %v332
    %v377 = vpack.c.b16 %v337, %v335
    %v378 = vpack.c.b16 %v338, %v336
    %v379 = vpack.c.b16 %v341, %v339
    %v380 = vpack.c.b16 %v342, %v340
    %v381 = vpack.c.b16 %v345, %v343
    %v382 = vpack.c.b16 %v346, %v344
    %v383 = vpack.c.b16 %v349, %v347
    %v384 = vpack.c.b16 %v350, %v348
    %v385 = vpack.c.b16 %v353, %v351
    %v386 = vpack.c.b16 %v354, %v352
    %419 = vmatprep.subr.bf16.mxu0 %v356
    %420 = vmatpush1.bf16.msra.mxu0 %v355
    %421 = vmatprep.subr.bf16.mxu0 %v358
    %422 = vmatpush1.bf16.msra.mxu0 %v357
    %423 = vmatprep.subr.bf16.mxu0 %v360
    %424 = vmatpush1.bf16.msra.mxu0 %v359
    %425 = vmatprep.subr.bf16.mxu0 %v362
    %426 = vmatpush1.bf16.msra.mxu0 %v361
    %427 = vmatprep.subr.bf16.mxu0 %v364
    %428 = vmatpush1.bf16.msra.mxu0 %v363
    %429 = vmatprep.subr.bf16.mxu0 %v366
    %430 = vmatpush1.bf16.msra.mxu0 %v365
    %431 = vmatprep.subr.bf16.mxu0 %v368
    %432 = vmatpush1.bf16.msra.mxu0 %v367
    %433 = vmatprep.subr.bf16.mxu0 %v370
    %434 = vmatpush1.bf16.msra.mxu0 %v369
    %435 = vmatprep.subr.bf16.mxu0 %v372
    %436 = vmatpush1.bf16.msra.mxu0 %v371
    %437 = vmatprep.subr.bf16.mxu0 %v374
    %438 = vmatpush1.bf16.msra.mxu0 %v373
    %439 = vmatprep.subr.bf16.mxu0 %v376
    %440 = vmatpush1.bf16.msra.mxu0 %v375
    %441 = vmatprep.subr.bf16.mxu0 %v378
    %442 = vmatpush1.bf16.msra.mxu0 %v377
    %443 = vmatprep.subr.bf16.mxu0 %v380
    %444 = vmatpush1.bf16.msra.mxu0 %v379
    %445 = vmatprep.subr.bf16.mxu0 %v382
    %446 = vmatpush1.bf16.msra.mxu0 %v381
    %447 = vmatprep.subr.bf16.mxu0 %v384
    %448 = vmatpush1.bf16.msra.mxu0 %v383
    %449 = vmatprep.subr.bf16.mxu0 %v386
    %450 = vmatpush1.bf16.msra.mxu0 %v385
    %451 = vmatprep.mubr.bf16.mxu0 %v214
    %452 = vmatmul.mubr.bf16.gmra.mrb[0].mxu0 %v213
    %v453 = vpop.f32.mrb[0].mxu0
    %v454 = vadd.f32 %v252, %v453
    %v455 = vpop.f32.mrb[0].mxu0
    %v456 = vadd.f32 %v256, %v455
    %v457 = vpop.f32.mrb[0].mxu0
    %v458 = vpop.f32.mrb[0].mxu0
    %459 = vdwg.mxu0
    %v460 = vmax.f32 %v454, 0.0
    %v461 = vmax.f32 %v456, 0.0
    %v462 = vpack.c.bf16 %v460, %v460
    %v463 = vpack.c.bf16 %v461, %v461
    %v464 = vld [vmem:[#allocation7] sm:$0xff]
    %v465 = vld [vmem:[#allocation7 + $0x8] sm:$0xff]
    %v466 = vld [vmem:[#allocation7 + $0x10] sm:$0xff]
    %v467 = vld [vmem:[#allocation7 + $0x18] sm:$0xff]
    %v468 = vld [vmem:[#allocation7 + $0x20] sm:$0xff]
    %v469 = vld [vmem:[#allocation7 + $0x28] sm:$0xff]
    %v470 = vld [vmem:[#allocation7 + $0x30] sm:$0xff]
    %v471 = vld [vmem:[#allocation7 + $0x38] sm:$0xff]
    %v472 = vld [vmem:[#allocation7 + $0x40] sm:$0xff]
    %v473 = vld [vmem:[#allocation7 + $0x48] sm:$0xff]
    %v474 = vld [vmem:[#allocation7 + $0x50] sm:$0xff]
    %v475 = vld [vmem:[#allocation7 + $0x58] sm:$0xff]
    %v476 = vld [vmem:[#allocation7 + $0x60] sm:$0xff]
    %v477 = vld [vmem:[#allocation7 + $0x68] sm:$0xff]
    %v478 = vld [vmem:[#allocation7 + $0x70] sm:$0xff]
    %v479 = vld [vmem:[#allocation7 + $0x78] sm:$0xff]
    %v480 = vld [vmem:[#allocation7 + $0x80] sm:$0xff]
    %v481 = vld [vmem:[#allocation7 + $0x88] sm:$0xff]
    %v482 = vld [vmem:[#allocation7 + $0x90] sm:$0xff]
    %v483 = vld [vmem:[#allocation7 + $0x98] sm:$0xff]
    %v484 = vld [vmem:[#allocation7 + $0xa0] sm:$0xff]
    %v485 = vld [vmem:[#allocation7 + $0xa8] sm:$0xff]
    %v486 = vld [vmem:[#allocation7 + $0xb0] sm:$0xff]
    %v487 = vld [vmem:[#allocation7 + $0xb8] sm:$0xff]
    %v488 = vld [vmem:[#allocation7 + $0xc0] sm:$0xff]
    %v489 = vld [vmem:[#allocation7 + $0xc8] sm:$0xff]
    %v490 = vld [vmem:[#allocation7 + $0xd0] sm:$0xff]
    %v491 = vld [vmem:[#allocation7 + $0xd8] sm:$0xff]
    %v492 = vld [vmem:[#allocation7 + $0xe0] sm:$0xff]
    %v493 = vld [vmem:[#allocation7 + $0xe8] sm:$0xff]
    %v494 = vld [vmem:[#allocation7 + $0xf0] sm:$0xff]
    %v495 = vld [vmem:[#allocation7 + $0xf8] sm:$0xff]
    %v496 = vld [vmem:[%s6] sm:$0x3]
    %v498 = vlaneseq
    %v499 = vshrl.u32 %v498, 7
    %v500 = vsub.s32 0, %v499
    %v501 = vrot.slane %v496, %v500
    %v502 = vlaneseq
    %v503 = vshrl.u32 %v502, 7
    %v504 = vsub.s32 1, %v503
    %v505 = vrot.slane %v496, %v504
    %v540 = vunpack.c.l.b16 %v464
    %v541 = vunpack.c.h.b16 %v464
    %v542 = vunpack.c.l.b16 %v465
    %v543 = vunpack.c.h.b16 %v465
    %v544 = vunpack.c.l.b16 %v466
    %v545 = vunpack.c.h.b16 %v466
    %v546 = vunpack.c.l.b16 %v467
    %v547 = vunpack.c.h.b16 %v467
    %v548 = vunpack.c.l.b16 %v468
    %v549 = vunpack.c.h.b16 %v468
    %v550 = vunpack.c.l.b16 %v469
    %v551 = vunpack.c.h.b16 %v469
    %v552 = vunpack.c.l.b16 %v470
    %v553 = vunpack.c.h.b16 %v470
    %v554 = vunpack.c.l.b16 %v471
    %v555 = vunpack.c.h.b16 %v471
    %v556 = vunpack.c.l.b16 %v472
    %v557 = vunpack.c.h.b16 %v472
    %v558 = vunpack.c.l.b16 %v473
    %v559 = vunpack.c.h.b16 %v473
    %v560 = vunpack.c.l.b16 %v474
    %v561 = vunpack.c.h.b16 %v474
    %v562 = vunpack.c.l.b16 %v475
    %v563 = vunpack.c.h.b16 %v475
    %v564 = vunpack.c.l.b16 %v476
    %v565 = vunpack.c.h.b16 %v476
    %v566 = vunpack.c.l.b16 %v477
    %v567 = vunpack.c.h.b16 %v477
    %v568 = vunpack.c.l.b16 %v478
    %v569 = vunpack.c.h.b16 %v478
    %v570 = vunpack.c.l.b16 %v479
    %v571 = vunpack.c.h.b16 %v479
    %v572 = vunpack.c.l.b16 %v480
    %v573 = vunpack.c.h.b16 %v480
    %v574 = vunpack.c.l.b16 %v481
    %v575 = vunpack.c.h.b16 %v481
    %v576 = vunpack.c.l.b16 %v482
    %v577 = vunpack.c.h.b16 %v482
    %v578 = vunpack.c.l.b16 %v483
    %v579 = vunpack.c.h.b16 %v483
    %v580 = vunpack.c.l.b16 %v484
    %v581 = vunpack.c.h.b16 %v484
    %v582 = vunpack.c.l.b16 %v485
    %v583 = vunpack.c.h.b16 %v485
    %v584 = vunpack.c.l.b16 %v486
    %v585 = vunpack.c.h.b16 %v486
    %v586 = vunpack.c.l.b16 %v487
    %v587 = vunpack.c.h.b16 %v487
    %v588 = vunpack.c.l.b16 %v488
    %v589 = vunpack.c.h.b16 %v488
    %v590 = vunpack.c.l.b16 %v489
    %v591 = vunpack.c.h.b16 %v489
    %v592 = vunpack.c.l.b16 %v490
    %v593 = vunpack.c.h.b16 %v490
    %v594 = vunpack.c.l.b16 %v491
    %v595 = vunpack.c.h.b16 %v491
    %v596 = vunpack.c.l.b16 %v492
    %v597 = vunpack.c.h.b16 %v492
    %v598 = vunpack.c.l.b16 %v493
    %v599 = vunpack.c.h.b16 %v493
    %v600 = vunpack.c.l.b16 %v494
    %v601 = vunpack.c.h.b16 %v494
    %v602 = vunpack.c.l.b16 %v495
    %v603 = vunpack.c.h.b16 %v495
    %v604 = vpack.c.b16 %v542, %v540
    %v605 = vpack.c.b16 %v543, %v541
    %v606 = vpack.c.b16 %v546, %v544
    %v607 = vpack.c.b16 %v547, %v545
    %v608 = vpack.c.b16 %v550, %v548
    %v609 = vpack.c.b16 %v551, %v549
    %v610 = vpack.c.b16 %v554, %v552
    %v611 = vpack.c.b16 %v555, %v553
    %v612 = vpack.c.b16 %v558, %v556
    %v613 = vpack.c.b16 %v559, %v557
    %v614 = vpack.c.b16 %v562, %v560
    %v615 = vpack.c.b16 %v563, %v561
    %v616 = vpack.c.b16 %v566, %v564
    %v617 = vpack.c.b16 %v567, %v565
    %v618 = vpack.c.b16 %v570, %v568
    %v619 = vpack.c.b16 %v571, %v569
    %v620 = vpack.c.b16 %v574, %v572
    %v621 = vpack.c.b16 %v575, %v573
    %v622 = vpack.c.b16 %v578, %v576
    %v623 = vpack.c.b16 %v579, %v577
    %v624 = vpack.c.b16 %v582, %v580
    %v625 = vpack.c.b16 %v583, %v581
    %v626 = vpack.c.b16 %v586, %v584
    %v627 = vpack.c.b16 %v587, %v585
    %v628 = vpack.c.b16 %v590, %v588
    %v629 = vpack.c.b16 %v591, %v589
    %v630 = vpack.c.b16 %v594, %v592
    %v631 = vpack.c.b16 %v595, %v593
    %v632 = vpack.c.b16 %v598, %v596
    %v633 = vpack.c.b16 %v599, %v597
    %v634 = vpack.c.b16 %v602, %v600
    %v635 = vpack.c.b16 %v603, %v601
    %668 = vmatprep.subr.bf16.mxu0 %v605
    %669 = vmatpush1.bf16.msra.mxu0 %v604
    %670 = vmatprep.subr.bf16.mxu0 %v607
    %671 = vmatpush1.bf16.msra.mxu0 %v606
    %672 = vmatprep.subr.bf16.mxu0 %v609
    %673 = vmatpush1.bf16.msra.mxu0 %v608
    %674 = vmatprep.subr.bf16.mxu0 %v611
    %675 = vmatpush1.bf16.msra.mxu0 %v610
    %676 = vmatprep.subr.bf16.mxu0 %v613
    %677 = vmatpush1.bf16.msra.mxu0 %v612
    %678 = vmatprep.subr.bf16.mxu0 %v615
    %679 = vmatpush1.bf16.msra.mxu0 %v614
    %680 = vmatprep.subr.bf16.mxu0 %v617
    %681 = vmatpush1.bf16.msra.mxu0 %v616
    %682 = vmatprep.subr.bf16.mxu0 %v619
    %683 = vmatpush1.bf16.msra.mxu0 %v618
    %684 = vmatprep.subr.bf16.mxu0 %v621
    %685 = vmatpush1.bf16.msra.mxu0 %v620
    %686 = vmatprep.subr.bf16.mxu0 %v623
    %687 = vmatpush1.bf16.msra.mxu0 %v622
    %688 = vmatprep.subr.bf16.mxu0 %v625
    %689 = vmatpush1.bf16.msra.mxu0 %v624
    %690 = vmatprep.subr.bf16.mxu0 %v627
    %691 = vmatpush1.bf16.msra.mxu0 %v626
    %692 = vmatprep.subr.bf16.mxu0 %v629
    %693 = vmatpush1.bf16.msra.mxu0 %v628
    %694 = vmatprep.subr.bf16.mxu0 %v631
    %695 = vmatpush1.bf16.msra.mxu0 %v630
    %696 = vmatprep.subr.bf16.mxu0 %v633
    %697 = vmatpush1.bf16.msra.mxu0 %v632
    %698 = vmatprep.subr.bf16.mxu0 %v635
    %699 = vmatpush1.bf16.msra.mxu0 %v634
    %700 = vmatprep.mubr.bf16.mxu0 %v463
    %701 = vmatmul.mubr.bf16.gmra.mrb[0].mxu0 %v462
    %v702 = vpop.f32.mrb[0].mxu0
    %v703 = vadd.f32 %v501, %v702
    %v704 = vpop.f32.mrb[0].mxu0
    %v705 = vadd.f32 %v505, %v704
    %v706 = vpop.f32.mrb[0].mxu0
    %v707 = vpop.f32.mrb[0].mxu0
    %708 = vdwg.mxu0
    %v709 = vmax.f32 %v703, 0.0
    %v710 = vmax.f32 %v705, 0.0
    %v711 = vpack.c.bf16 %v709, %v709
    %v712 = vpack.c.bf16 %v710, %v710
    %v713 = vld [vmem:[#allocation9] sm:$0xf]
    %v714 = vld [vmem:[#allocation9 + $0x4] sm:$0xf]
    %v715 = vld [vmem:[#allocation9 + $0x8] sm:$0xf]
    %v716 = vld [vmem:[#allocation9 + $0xc] sm:$0xf]
    %v717 = vld [vmem:[#allocation9 + $0x10] sm:$0xf]
    %v718 = vld [vmem:[#allocation9 + $0x14] sm:$0xf]
    %v719 = vld [vmem:[#allocation9 + $0x18] sm:$0xf]
    %v720 = vld [vmem:[#allocation9 + $0x1c] sm:$0xf]
    %v721 = vld [vmem:[#allocation9 + $0x20] sm:$0xf]
    %v722 = vld [vmem:[#allocation9 + $0x24] sm:$0xf]
    %v723 = vld [vmem:[#allocation9 + $0x28] sm:$0xf]
    %v724 = vld [vmem:[#allocation9 + $0x2c] sm:$0xf]
    %v725 = vld [vmem:[#allocation9 + $0x30] sm:$0xf]
    %v726 = vld [vmem:[#allocation9 + $0x34] sm:$0xf]
    %v727 = vld [vmem:[#allocation9 + $0x38] sm:$0xf]
    %v728 = vld [vmem:[#allocation9 + $0x3c] sm:$0xf]
    %v729 = vld [vmem:[#allocation9 + $0x40] sm:$0xf]
    %v730 = vld [vmem:[#allocation9 + $0x44] sm:$0xf]
    %v731 = vld [vmem:[#allocation9 + $0x48] sm:$0xf]
    %v732 = vld [vmem:[#allocation9 + $0x4c] sm:$0xf]
    %v733 = vld [vmem:[#allocation9 + $0x50] sm:$0xf]
    %v734 = vld [vmem:[#allocation9 + $0x54] sm:$0xf]
    %v735 = vld [vmem:[#allocation9 + $0x58] sm:$0xf]
    %v736 = vld [vmem:[#allocation9 + $0x5c] sm:$0xf]
    %v737 = vld [vmem:[#allocation9 + $0x60] sm:$0xf]
    %v738 = vld [vmem:[#allocation9 + $0x64] sm:$0xf]
    %v739 = vld [vmem:[#allocation9 + $0x68] sm:$0xf]
    %v740 = vld [vmem:[#allocation9 + $0x6c] sm:$0xf]
    %v741 = vld [vmem:[#allocation9 + $0x70] sm:$0xf]
    %v742 = vld [vmem:[#allocation9 + $0x74] sm:$0xf]
    %v743 = vld [vmem:[#allocation9 + $0x78] sm:$0xf]
    %v744 = vld [vmem:[#allocation9 + $0x7c] sm:$0xf]
    %v745 = vld [vmem:[%s8] sm:$0x1]
    %v747 = vlaneseq
    %v748 = vshrl.u32 %v747, 7
    %v749 = vsub.s32 0, %v748
    %v750 = vrot.slane %v745, %v749
    %v784 = vunpack.c.l.b16 %v713
    %v785 = vunpack.c.l.b16 %v714
    %v786 = vunpack.c.l.b16 %v715
    %v787 = vunpack.c.l.b16 %v716
    %v788 = vunpack.c.l.b16 %v717
    %v789 = vunpack.c.l.b16 %v718
    %v790 = vunpack.c.l.b16 %v719
    %v791 = vunpack.c.l.b16 %v720
    %v792 = vunpack.c.l.b16 %v721
    %v793 = vunpack.c.l.b16 %v722
    %v794 = vunpack.c.l.b16 %v723
    %v795 = vunpack.c.l.b16 %v724
    %v796 = vunpack.c.l.b16 %v725
    %v797 = vunpack.c.l.b16 %v726
    %v798 = vunpack.c.l.b16 %v727
    %v799 = vunpack.c.l.b16 %v728
    %v800 = vunpack.c.l.b16 %v729
    %v801 = vunpack.c.l.b16 %v730
    %v802 = vunpack.c.l.b16 %v731
    %v803 = vunpack.c.l.b16 %v732
    %v804 = vunpack.c.l.b16 %v733
    %v805 = vunpack.c.l.b16 %v734
    %v806 = vunpack.c.l.b16 %v735
    %v807 = vunpack.c.l.b16 %v736
    %v808 = vunpack.c.l.b16 %v737
    %v809 = vunpack.c.l.b16 %v738
    %v810 = vunpack.c.l.b16 %v739
    %v811 = vunpack.c.l.b16 %v740
    %v812 = vunpack.c.l.b16 %v741
    %v813 = vunpack.c.l.b16 %v742
    %v814 = vunpack.c.l.b16 %v743
    %v815 = vunpack.c.l.b16 %v744
    %v816 = vpack.c.b16 %v785, %v784
    %v817 = vpack.c.b16 %v787, %v786
    %v818 = vpack.c.b16 %v789, %v788
    %v819 = vpack.c.b16 %v791, %v790
    %v820 = vpack.c.b16 %v793, %v792
    %v821 = vpack.c.b16 %v795, %v794
    %v822 = vpack.c.b16 %v797, %v796
    %v823 = vpack.c.b16 %v799, %v798
    %v824 = vpack.c.b16 %v801, %v800
    %v825 = vpack.c.b16 %v803, %v802
    %v826 = vpack.c.b16 %v805, %v804
    %v827 = vpack.c.b16 %v807, %v806
    %v828 = vpack.c.b16 %v809, %v808
    %v829 = vpack.c.b16 %v811, %v810
    %v830 = vpack.c.b16 %v813, %v812
    %v831 = vpack.c.b16 %v815, %v814
    %848 = vmatprep.subr.bf16.mxu0 0
    %849 = vmatpush1.bf16.msra.mxu0 %v816
    %850 = vmatprep.subr.bf16.mxu0 0
    %851 = vmatpush1.bf16.msra.mxu0 %v817
    %852 = vmatprep.subr.bf16.mxu0 0
    %853 = vmatpush1.bf16.msra.mxu0 %v818
    %854 = vmatprep.subr.bf16.mxu0 0
    %855 = vmatpush1.bf16.msra.mxu0 %v819
    %856 = vmatprep.subr.bf16.mxu0 0
    %857 = vmatpush1.bf16.msra.mxu0 %v820
    %858 = vmatprep.subr.bf16.mxu0 0
    %859 = vmatpush1.bf16.msra.mxu0 %v821
    %860 = vmatprep.subr.bf16.mxu0 0
    %861 = vmatpush1.bf16.msra.mxu0 %v822
    %862 = vmatprep.subr.bf16.mxu0 0
    %863 = vmatpush1.bf16.msra.mxu0 %v823
    %864 = vmatprep.subr.bf16.mxu0 0
    %865 = vmatpush1.bf16.msra.mxu0 %v824
    %866 = vmatprep.subr.bf16.mxu0 0
    %867 = vmatpush1.bf16.msra.mxu0 %v825
    %868 = vmatprep.subr.bf16.mxu0 0
    %869 = vmatpush1.bf16.msra.mxu0 %v826
    %870 = vmatprep.subr.bf16.mxu0 0
    %871 = vmatpush1.bf16.msra.mxu0 %v827
    %872 = vmatprep.subr.bf16.mxu0 0
    %873 = vmatpush1.bf16.msra.mxu0 %v828
    %874 = vmatprep.subr.bf16.mxu0 0
    %875 = vmatpush1.bf16.msra.mxu0 %v829
    %876 = vmatprep.subr.bf16.mxu0 0
    %877 = vmatpush1.bf16.msra.mxu0 %v830
    %878 = vmatprep.subr.bf16.mxu0 0
    %879 = vmatpush1.bf16.msra.mxu0 %v831
    %880 = vmatprep.mubr.bf16.mxu0 %v712
    %881 = vmatmul.mubr.bf16.gmra.mrb[0].mxu0 %v711
    %v882 = vpop.f32.mrb[0].mxu0
    %v883 = vadd.f32 %v750, %v882
    %v884 = vpop.f32.mrb[0].mxu0
    %v885 = vpop.f32.mrb[0].mxu0
    %v886 = vpop.f32.mrb[0].mxu0
    %887 = vdwg.mxu0
    %v888 = vpack.c.bf16 %v883, %v883
    %889 = vst [vmem:[%s9] sm:$0xf] %v888
    // Predicated region
    $region58: #{mlp_forward.1} parent=1 // pred_check
      _
    $region59: #{mlp_forward.1} parent=1 // pred_check_branch
      %891 = sbr.rel (0) target = $region61
    $region60: #{mlp_forward.1} parent=1 // pred_region
      _
    $region61: #{mlp_forward.1} parent=1 // pred_fallthru
      _
    // Predicated region
    $region62: #{mlp_forward.1} parent=1 // pred_check
      _
    $region63: #{mlp_forward.1} parent=1 // pred_check_branch
      %893 = sbr.rel (0) target = $region65
    $region64: #{mlp_forward.1} parent=1 // pred_region
      _
    $region65: #{mlp_forward.1} parent=1 // pred_fallthru
      _
    %894 = vsyncpa [#allocation3], 1
    %895 = vsyncpa [#allocation5], 1
    %896 = vsyncpa [#allocation8], 1

</llo_original>
